<compile_context>
chip_gen: v7x
topology: tpu7x:2x2x1
jax: 0.10.0
libtpu: 0.0.40
codegen_flags: <defaults>
</compile_context>

<pallas_src>
import jax
import jax.numpy as jnp
from jax.experimental import pallas as pl
from jax.experimental.pallas import tpu as pltpu

_LANE = 128
_SUBLANE = 8


def _round_up(x, m):
    return ((x + m - 1) // m) * m


def _cdiv(a, b):
    return (a + b - 1) // b


def _buf_bytes(rows, cols, itemsize):
    # VMEM tiles are padded to (8, 128); approximate the padded footprint.
    return _round_up(max(rows, 1), _SUBLANE) * _round_up(max(cols, 1), _LANE) * itemsize


def _vmem_cap_bytes():
    """Generation-aware usable-VMEM budget (~80% of physical capacity)."""
    try:
        cap = int(pltpu.get_tpu_info().vmem_capacity_bytes)
    except Exception:
        cap = 64 * 1024 * 1024  # conservative: v7x per-TensorCore physical VMEM
    return int(cap * 0.8)


def _resident_spec(shape):
    """Constant-index (resident) BlockSpec, single-buffered when supported."""
    index_map = lambda i: (0,) * len(shape)
    try:
        return pl.BlockSpec(shape, index_map, pipeline_mode=pl.Buffered(1))
    except (TypeError, AttributeError):
        return pl.BlockSpec(shape, index_map)


def _mlp_kernel(x_ref, w1_ref, b1_ref, w2_ref, b2_ref, w3_ref, b3_ref, out_ref):
    # Three MXU matmuls with f32 accumulation; bias add (f32 biases) + ReLU on the VPU.
    cdt = w1_ref.dtype
    x = x_ref[...].astype(cdt)  # in-kernel cast (f32 HBM input -> bf16 MXU input)

    h1 = jnp.dot(x, w1_ref[...], preferred_element_type=jnp.float32)
    h1 = jnp.maximum(h1 + b1_ref[...], 0.0).astype(cdt)

    h2 = jnp.dot(h1, w2_ref[...], preferred_element_type=jnp.float32)
    h2 = jnp.maximum(h2 + b2_ref[...], 0.0).astype(cdt)

    y = jnp.dot(h2, w3_ref[...], preferred_element_type=jnp.float32)
    out_ref[...] = (y + b3_ref[...]).astype(out_ref.dtype)


def prepare_params(params, compute_dtype=jnp.bfloat16):
    """Pad + cast weights once (call this outside the per-step forward).

    Weight matrices are zero-padded so the contraction/hidden dims are lane-dense
    (multiples of 128) and cast to `compute_dtype`; biases stay f32. The output
    feature dim is deliberately NOT padded (masked store of the real lanes).
    """
    w1, b1 = params["w1"], params["b1"]
    w2, b2 = params["w2"], params["b2"]
    w3, b3 = params["w3"], params["b3"]

    I, H = w1.shape
    O = w3.shape[1]
    Ip, Hp = _round_up(I, _LANE), _round_up(H, _LANE)
    cdt = jnp.dtype(compute_dtype)

    def padw(a, rows, cols):
        return jnp.pad(a, ((0, rows - a.shape[0]), (0, cols - a.shape[1]))).astype(cdt)

    def padb(a, cols):
        return jnp.pad(a, ((0, 0), (0, cols - a.shape[1]))).astype(jnp.float32)

    return dict(
        w1=padw(w1, Ip, Hp), b1=padb(b1, Hp),
        w2=padw(w2, Hp, Hp), b2=padb(b2, Hp),
        w3=padw(w3, Hp, O),  b3=padb(b3, O),
        dims=dict(I=I, H=H, O=O, Ip=Ip, Hp=Hp),
        compute_dtype=cdt,
    )


def federated_model_forward(x, prepared, *, batch_tile=512):
    """FederatedModel forward pass via a Pallas TPU kernel.

    x: [B, input_size] float32
    prepared: output of `prepare_params` (padded weights cached across calls)
    Returns [B, output_size] float32.
    """
    dims = prepared["dims"]
    I, O, Ip, Hp = dims["I"], dims["O"], dims["Ip"], dims["Hp"]
    cdt = prepared["compute_dtype"]
    w1, b1 = prepared["w1"], prepared["b1"]
    w2, b2 = prepared["w2"], prepared["b2"]
    w3, b3 = prepared["w3"], prepared["b3"]

    B = x.shape[0]
    assert x.shape[1] == I, f"expected input feature dim {I}, got {x.shape[1]}"

    # ---- VMEM budgeting (generation-aware) ----------------------------------
    cap = _vmem_cap_bytes()
    wsz = cdt.itemsize
    weight_bytes = (
        _buf_bytes(Ip, Hp, wsz)      # w1 (single-buffered, resident)
        + _buf_bytes(Hp, Hp, wsz)    # w2
        + _buf_bytes(Hp, O, wsz)     # w3
        + 2 * _buf_bytes(1, Hp, 4)   # b1, b2 (f32)
        + _buf_bytes(1, O, 4)        # b3 (f32)
    )
    if weight_bytes > cap:
        # TODO(synk): add a K/N-tiled accumulator fallback (2nd grid axis over Hp,
        # f32 VMEM accumulator with pl.when init/finalize, marked "arbitrary") for
        # hidden sizes too large to keep resident in v7x's 64 MiB/TC VMEM.
        raise ValueError(
            f"resident weights ({weight_bytes} B) exceed the VMEM budget ({cap} B); "
            "K/N-tiled fallback not implemented")

    # Batch tile: multiple of 8 sublanes, sized from B so the grid has enough steps
    # to shard across 2 TensorCores (v7x) and keep each core's pipeline deep.
    tb = max(_SUBLANE, min(_round_up(batch_tile, _SUBLANE),
                           _round_up(_cdiv(B, 8), _SUBLANE)))

    def act_bytes(t):
        return (2 * _buf_bytes(t, Ip, 4)     # x tile (f32), double-buffered
                + 2 * _buf_bytes(t, O, 4)    # out tile (f32), double-buffered
                + 4 * _buf_bytes(t, Hp, 4))  # h1/h2 f32 intermediates + casts headroom

    while tb > _SUBLANE and weight_bytes + act_bytes(tb) > cap:
        tb = max(_SUBLANE, _round_up(tb // 2, _SUBLANE))

    Bp = _round_up(B, tb)

    # Pad x only when the shapes require it (kept f32; bf16 cast happens in-kernel).
    if Bp != B or Ip != I:
        xp = jnp.pad(x, ((0, Bp - B), (0, Ip - I)))
    else:
        xp = x

    vmem_needed = weight_bytes + act_bytes(tb)
    vmem_limit = int(min(cap, max(int(1.5 * vmem_needed), 16 * 1024 * 1024)))

    grid = (Bp // tb,)

    out = pl.pallas_call(
        _mlp_kernel,
        out_shape=jax.ShapeDtypeStruct((Bp, O), jnp.float32),
        grid_spec=pltpu.PrefetchScalarGridSpec(
            num_scalar_prefetch=0,
            grid=grid,
            in_specs=[
                pl.BlockSpec((tb, Ip), lambda i: (i, 0)),  # x tile (pipelined, f32)
                _resident_spec((Ip, Hp)),                  # w1 (resident, 1 buffer)
                _resident_spec((1, Hp)),                   # b1 (f32)
                _resident_spec((Hp, Hp)),                  # w2
                _resident_spec((1, Hp)),                   # b2
                _resident_spec((Hp, O)),                   # w3 (real O lanes)
                _resident_spec((1, O)),                    # b3 (f32)
            ],
            # Masked store of the real O lanes (no Op padding / write amplification).
            out_specs=pl.BlockSpec((tb, O), lambda i: (i, 0)),
        ),
        compiler_params=pltpu.CompilerParams(
            dimension_semantics=("parallel",),
            vmem_limit_bytes=vmem_limit,
        ),
    )(xp, w1, b1, w2, b2, w3, b3)

    # No-op when B is a multiple of tb (the common case).
    return out if Bp == B else out[:B]


def init_params(key, input_size, hidden_size, output_size):
    """Deterministic synthetic parameter init (shapes match the nn.Linear stack)."""
    ks = jax.random.split(key, 6)

    def lin(kw, kb, fan_in, fan_out):
        bound = 1.0 / jnp.sqrt(fan_in)
        w = jax.random.uniform(kw, (fan_in, fan_out), jnp.float32, -bound, bound)
        b = jax.random.uniform(kb, (1, fan_out), jnp.float32, -bound, bound)
        return w, b

    w1, b1 = lin(ks[0], ks[1], input_size, hidden_size)
    w2, b2 = lin(ks[2], ks[3], hidden_size, hidden_size)
    w3, b3 = lin(ks[4], ks[5], hidden_size, output_size)
    return dict(w1=w1, b1=b1, w2=w2, b2=b2, w3=w3, b3=b3)


def reference_forward(x, params, compute_dtype=jnp.float32):
    """Pure-JAX reference mirroring the kernel: compute-dtype matmul inputs,
    f32 accumulation, f32 biases, ReLU."""
    cdt = jnp.dtype(compute_dtype)
    h = x.astype(cdt)
    h = jnp.maximum(jnp.dot(h, params["w1"].astype(cdt),
                            preferred_element_type=jnp.float32) + params["b1"], 0.0)
    h = jnp.maximum(jnp.dot(h.astype(cdt), params["w2"].astype(cdt),
                            preferred_element_type=jnp.float32) + params["b2"], 0.0)
    return jnp.dot(h.astype(cdt), params["w3"].astype(cdt),
                   preferred_element_type=jnp.float32) + params["b3"]


if __name__ == "__main__":
    input_size, hidden_size, output_size = 32, 64, 16
    batch = 16

    key = jax.random.PRNGKey(0)
    kx, kp = jax.random.split(key)
    x = jax.random.normal(kx, (batch, input_size), jnp.float32)
    params = init_params(kp, input_size, hidden_size, output_size)

    # f32 compute path: strict correctness check (tb=8 -> 2 pipelined grid steps).
    prep_f32 = prepare_params(params, compute_dtype=jnp.float32)
    out_f32 = jax.block_until_ready(federated_model_forward(x, prep_f32))
    ref_f32 = reference_forward(x, params, jnp.float32)
    assert out_f32.shape == (batch, output_size)
    assert jnp.allclose(out_f32, ref_f32, atol=1e-5, rtol=1e-5)

    # bf16 fast path (default): f32 biases/accumulation; loose check vs bf16 reference.
    prep_bf16 = prepare_params(params, compute_dtype=jnp.bfloat16)
    out_bf16 = jax.block_until_ready(federated_model_forward(x, prep_bf16))
    ref_bf16 = reference_forward(x, params, jnp.bfloat16)
    assert out_bf16.shape == (batch, output_size)
    assert jnp.allclose(out_bf16, ref_bf16, atol=5e-2, rtol=5e-2)

    print("KERNEL_OK")
</pallas_src>

<mosaic_0001>
module attributes {stable_mosaic.version = 11 : i64} {
  func.func @_mlp_kernel(%arg0: i32, %arg1: memref<8x128xf32, #tpu.memory_space<vmem>>, %arg2: memref<128x128xf32, #tpu.memory_space<vmem>>, %arg3: memref<1x128xf32, #tpu.memory_space<vmem>>, %arg4: memref<128x128xf32, #tpu.memory_space<vmem>>, %arg5: memref<1x128xf32, #tpu.memory_space<vmem>>, %arg6: memref<128x16xf32, #tpu.memory_space<vmem>>, %arg7: memref<1x16xf32, #tpu.memory_space<vmem>>, %arg8: memref<8x16xf32, #tpu.memory_space<vmem>>) attributes {dimension_semantics = [#tpu.dimension_semantics<parallel>], iteration_bounds = array<i64: 2>, scalar_prefetch = 0 : i64, scratch_operands = 0 : i64, tpu.core_type = #tpu.core_type<tc>, window_params = [{transform_indices = @transform_0, window_bounds = array<i64: 8, 128>}, {pipeline_mode = #tpu.pipeline_mode<synchronous>, transform_indices = @transform_1, window_bounds = array<i64: 128, 128>}, {pipeline_mode = #tpu.pipeline_mode<synchronous>, transform_indices = @transform_2, window_bounds = array<i64: 1, 128>}, {pipeline_mode = #tpu.pipeline_mode<synchronous>, transform_indices = @transform_3, window_bounds = array<i64: 128, 128>}, {pipeline_mode = #tpu.pipeline_mode<synchronous>, transform_indices = @transform_4, window_bounds = array<i64: 1, 128>}, {pipeline_mode = #tpu.pipeline_mode<synchronous>, transform_indices = @transform_5, window_bounds = array<i64: 128, 16>}, {pipeline_mode = #tpu.pipeline_mode<synchronous>, transform_indices = @transform_6, window_bounds = array<i64: 1, 16>}, {transform_indices = @transform_7, window_bounds = array<i64: 8, 16>}]} {
    %c0 = arith.constant 0 : index
    %c0_0 = arith.constant 0 : index
    %0 = vector.load %arg1[%c0, %c0_0] : memref<8x128xf32, #tpu.memory_space<vmem>>, vector<8x128xf32>
    %c0_1 = arith.constant 0 : index
    %c0_2 = arith.constant 0 : index
    %1 = vector.load %arg2[%c0_1, %c0_2] : memref<128x128xf32, #tpu.memory_space<vmem>>, vector<128x128xf32>
    %cst = arith.constant dense<0.000000e+00> : vector<8x128xf32>
    %2 = tpu.matmul %0, %1, %cst {dimension_numbers = #tpu.dot_dimension_numbers<[1], [0], [0], [1], [0, 0, 1, 1], [], []>} : vector<8x128xf32>, vector<128x128xf32>, vector<8x128xf32> -> vector<8x128xf32>
    %c0_3 = arith.constant 0 : index
    %c0_4 = arith.constant 0 : index
    %3 = vector.load %arg3[%c0_3, %c0_4] : memref<1x128xf32, #tpu.memory_space<vmem>>, vector<1x128xf32>
    %4 = vector.broadcast %3 : vector<1x128xf32> to vector<8x128xf32>
    %5 = arith.addf %2, %4 : vector<8x128xf32>
    %cst_5 = arith.constant 0.000000e+00 : f32
    %6 = vector.broadcast %cst_5 : f32 to vector<8x128xf32>
    %7 = arith.maximumf %5, %6 : vector<8x128xf32>
    %c0_6 = arith.constant 0 : index
    %c0_7 = arith.constant 0 : index
    %8 = vector.load %arg4[%c0_6, %c0_7] : memref<128x128xf32, #tpu.memory_space<vmem>>, vector<128x128xf32>
    %cst_8 = arith.constant dense<0.000000e+00> : vector<8x128xf32>
    %9 = tpu.matmul %7, %8, %cst_8 {dimension_numbers = #tpu.dot_dimension_numbers<[1], [0], [0], [1], [0, 0, 1, 1], [], []>} : vector<8x128xf32>, vector<128x128xf32>, vector<8x128xf32> -> vector<8x128xf32>
    %c0_9 = arith.constant 0 : index
    %c0_10 = arith.constant 0 : index
    %10 = vector.load %arg5[%c0_9, %c0_10] : memref<1x128xf32, #tpu.memory_space<vmem>>, vector<1x128xf32>
    %11 = vector.broadcast %10 : vector<1x128xf32> to vector<8x128xf32>
    %12 = arith.addf %9, %11 : vector<8x128xf32>
    %cst_11 = arith.constant 0.000000e+00 : f32
    %13 = vector.broadcast %cst_11 : f32 to vector<8x128xf32>
    %14 = arith.maximumf %12, %13 : vector<8x128xf32>
    %c0_12 = arith.constant 0 : index
    %c0_13 = arith.constant 0 : index
    %15 = vector.load %arg6[%c0_12, %c0_13] : memref<128x16xf32, #tpu.memory_space<vmem>>, vector<128x16xf32>
    %cst_14 = arith.constant dense<0.000000e+00> : vector<8x16xf32>
    %16 = tpu.matmul %14, %15, %cst_14 {dimension_numbers = #tpu.dot_dimension_numbers<[1], [0], [0], [1], [0, 0, 1, 1], [], []>} : vector<8x128xf32>, vector<128x16xf32>, vector<8x16xf32> -> vector<8x16xf32>
    %c0_15 = arith.constant 0 : index
    %c0_16 = arith.constant 0 : index
    %17 = vector.load %arg7[%c0_15, %c0_16] : memref<1x16xf32, #tpu.memory_space<vmem>>, vector<1x16xf32>
    %18 = vector.broadcast %17 : vector<1x16xf32> to vector<8x16xf32>
    %19 = arith.addf %16, %18 : vector<8x16xf32>
    %c0_17 = arith.constant 0 : index
    %c0_18 = arith.constant 0 : index
    %20 = vector.load %arg8[%c0_17, %c0_18] : memref<8x16xf32, #tpu.memory_space<vmem>>, vector<8x16xf32>
    tpu.vector_store %arg8[%c0_17, %c0_18], %19 {strides = array<i32>} : memref<8x16xf32, #tpu.memory_space<vmem>>, vector<8x16xf32>,
    return
  }
  func.func @transform_0(%arg0: i32) -> (i32, i32) {
    %c0_i32 = arith.constant 0 : i32
    %c0_i32_0 = arith.constant 0 : i32
    return %arg0, %c0_i32 : i32, i32
  }
  func.func @transform_1(%arg0: i32) -> (i32, i32) {
    %c0_i32 = arith.constant 0 : i32
    %c0_i32_0 = arith.constant 0 : i32
    %c0_i32_1 = arith.constant 0 : i32
    return %c0_i32, %c0_i32_0 : i32, i32
  }
  func.func @transform_2(%arg0: i32) -> (i32, i32) {
    %c0_i32 = arith.constant 0 : i32
    %c0_i32_0 = arith.constant 0 : i32
    %c0_i32_1 = arith.constant 0 : i32
    return %c0_i32, %c0_i32_0 : i32, i32
  }
  func.func @transform_3(%arg0: i32) -> (i32, i32) {
    %c0_i32 = arith.constant 0 : i32
    %c0_i32_0 = arith.constant 0 : i32
    %c0_i32_1 = arith.constant 0 : i32
    return %c0_i32, %c0_i32_0 : i32, i32
  }
  func.func @transform_4(%arg0: i32) -> (i32, i32) {
    %c0_i32 = arith.constant 0 : i32
    %c0_i32_0 = arith.constant 0 : i32
    %c0_i32_1 = arith.constant 0 : i32
    return %c0_i32, %c0_i32_0 : i32, i32
  }
  func.func @transform_5(%arg0: i32) -> (i32, i32) {
    %c0_i32 = arith.constant 0 : i32
    %c0_i32_0 = arith.constant 0 : i32
    %c0_i32_1 = arith.constant 0 : i32
    return %c0_i32, %c0_i32_0 : i32, i32
  }
  func.func @transform_6(%arg0: i32) -> (i32, i32) {
    %c0_i32 = arith.constant 0 : i32
    %c0_i32_0 = arith.constant 0 : i32
    %c0_i32_1 = arith.constant 0 : i32
    return %c0_i32, %c0_i32_0 : i32, i32
  }
  func.func @transform_7(%arg0: i32) -> (i32, i32) {
    %c0_i32 = arith.constant 0 : i32
    %c0_i32_0 = arith.constant 0 : i32
    return %arg0, %c0_i32 : i32, i32
  }
}

</mosaic_0001>

<llo_original>
// kernel: tpu_custom_call.1
$region0: #{tpu_custom_call.1}
  #allocation0 [shape = 'u32[]', space=smem, size = 0x4, offset = 0x4, fixed_abs, tag = 'smem constant byte address 0x4 - core index']
  #allocation1 [shape = 'u32[144,128]{1,0:T(1,128)}', space=vmem, size = 0x12000, scoped, tag = 'internal scratch']
  %s0 = inlined_call_operand.vmem [shape: f32[16,128], index: 0, kind: input, shape index: {}]
  %s1 = inlined_call_operand.vmem [shape: f32[128,128], index: 1, kind: input, shape index: {}]
  %s2 = inlined_call_operand.vmem [shape: f32[1,128], index: 2, kind: input, shape index: {}]
  %s3 = inlined_call_operand.hbm [shape: f32[128,128], index: 3, kind: input, shape index: {}]
  %s4 = inlined_call_operand.vmem [shape: f32[1,128], index: 4, kind: input, shape index: {}]
  %s5 = inlined_call_operand.vmem [shape: f32[128,16], index: 5, kind: input, shape index: {}]
  %s6 = inlined_call_operand.vmem [shape: f32[1,16], index: 6, kind: input, shape index: {}]
  %s7 = inlined_call_operand.hbm [shape: f32[16,16], index: 7, kind: output, shape index: {}]
  %s8 = sld [smem:[#allocation0]]
  $region65: #{tpu_custom_call.1} parent=0
    _
  %s10 = ssub.s32 1, %s8
  %s11 = scalar_select 0, %s10, %s8
  $region1: #{tpu_custom_call.1} parent=0
    #allocation2 [shape = 'u8[65536]{0}', space=vmem, size = 0x10000, scoped, tag = 'input window, operand 3, single buffered']
    #allocation3 [shape = 's32[2]{0}', space=sflag, size = 0x8, scoped, tag = 'scoped memory for tpu_custom_call.1']
    #allocation4 [shape = 's32[2]{0}', space=sflag, size = 0x8, scoped, tag = 'scoped memory for tpu_custom_call.1']
    #allocation5 [shape = 'u8[8192]{0}', space=vmem, size = 0x2000, scoped, tag = 'output window, operand 0']
    %12 = vsyncpa [#allocation3], 0
    %13 = vsyncpa [#allocation4], 0
    %s14 = scalar_lea.sflag [#allocation4], 1
    %15 = vsyncpa %s14, 0
    loop: start=0, step=1, limit=4
    $region2: #{tpu_custom_call.1} parent=1 // loop_pre_header
      _
    $region3: #{tpu_custom_call.1} parent=1 // loop_header
      %s17 = sphi 0, %s21
      %p18 = scmp.ge.s32.totalorder %s17, 4
      %s27 = sphi 0, %s29
      %s30 = sphi 0, %s27
      %s31 = sphi 0, %s30
      %s47 = sphi 0, %s31
      %s51 = sphi 0, %s51
      %s53 = sphi 0, %s51
      %s54 = sphi 0, %s53
      %s68 = sphi 0, %s54
      %s72 = sphi 0, %s72
      %s74 = sphi 0, %s72
      %s75 = sphi 0, %s74
      %s89 = sphi 0, %s75
      %s93 = sphi 0, %s93
      %s95 = sphi 0, %s93
      %s96 = sphi 0, %s95
      %s110 = sphi 0, %s96
      %s114 = sphi 0, %s114
      %s116 = sphi 0, %s114
      %s117 = sphi 0, %s116
      %s131 = sphi 0, %s117
      %s135 = sphi 0, %s135
      %s137 = sphi 0, %s135
      %s138 = sphi 0, %s137
      %s152 = sphi 0, %s138
      %s156 = sphi 0, %s156
      %s158 = sphi 0, %s156
      %s159 = sphi 0, %s158
      %s173 = sphi 0, %s159
      %s179 = sphi 0, %s181
      %s182 = sphi 0, %s179
      %s183 = sphi 0, %s182
      %s199 = sphi 0, %s183
    $region4: #{tpu_custom_call.1} parent=1 // loop_header_branch
      %20 = sbr.rel (%p18) target = $region8
    $region5: #{tpu_custom_call.1} parent=1 // loop_body
      %s22 = ssub.s32 %s17, 1
      %s23 = ssub.s32 %s17, 2
      %s24 = sadd.s32 %s17, 1
      %s25 = ssub.s32 %s17, %s24
      %p26 = scmp.eq.s32.totalorder %s25, 0
      %s28 = sadd.s32 %s27, 1
      %s29 = scalar_select %p26, %s27, %s28
      %p32 = pneg %p26
      %p33 = scmp.eq.s32.totalorder %s17, 1
      %p34 = por %p32, %p33
      %p35 = scmp.ne.s32.totalorder %s27, %s30
      %p36 = scmp.eq.s32.totalorder %s17, 0
      %p37 = por %p35, %p36
      %p38 = scmp.ne.s32.totalorder %s27, %s30
      %p39 = scmp.eq.s32.totalorder %s22, 1
      %p40 = por %p38, %p39
      %p41 = scmp.ne.s32.totalorder %s30, %s31
      %p42 = scmp.eq.s32.totalorder %s22, 0
      %p43 = por %p41, %p42
      %p44 = scmp.ne.s32.totalorder %s30, %s31
      %p45 = scmp.eq.s32.totalorder %s23, 1
      %p46 = por %p44, %p45
      %p48 = scmp.ne.s32.totalorder %s31, %s47
      %p49 = scmp.eq.s32.totalorder %s23, 0
      %p50 = por %p48, %p49
      %s52 = sadd.s32 %s51, 1
      %p55 = scmp.eq.s32.totalorder %s17, 1
      %p56 = scmp.ne.s32.totalorder %s51, %s53
      %p57 = scmp.eq.s32.totalorder %s17, 0
      %p58 = por %p56, %p57
      %p59 = scmp.ne.s32.totalorder %s51, %s53
      %p60 = scmp.eq.s32.totalorder %s22, 1
      %p61 = por %p59, %p60
      %p62 = scmp.ne.s32.totalorder %s53, %s54
      %p63 = scmp.eq.s32.totalorder %s22, 0
      %p64 = por %p62, %p63
      %p65 = scmp.ne.s32.totalorder %s53, %s54
      %p66 = scmp.eq.s32.totalorder %s23, 1
      %p67 = por %p65, %p66
      %p69 = scmp.ne.s32.totalorder %s54, %s68
      %p70 = scmp.eq.s32.totalorder %s23, 0
      %p71 = por %p69, %p70
      %s73 = sadd.s32 %s72, 1
      %p76 = scmp.eq.s32.totalorder %s17, 1
      %p77 = scmp.ne.s32.totalorder %s72, %s74
      %p78 = scmp.eq.s32.totalorder %s17, 0
      %p79 = por %p77, %p78
      %p80 = scmp.ne.s32.totalorder %s72, %s74
      %p81 = scmp.eq.s32.totalorder %s22, 1
      %p82 = por %p80, %p81
      %p83 = scmp.ne.s32.totalorder %s74, %s75
      %p84 = scmp.eq.s32.totalorder %s22, 0
      %p85 = por %p83, %p84
      %p86 = scmp.ne.s32.totalorder %s74, %s75
      %p87 = scmp.eq.s32.totalorder %s23, 1
      %p88 = por %p86, %p87
      %p90 = scmp.ne.s32.totalorder %s75, %s89
      %p91 = scmp.eq.s32.totalorder %s23, 0
      %p92 = por %p90, %p91
      %s94 = sadd.s32 %s93, 1
      %p97 = scmp.eq.s32.totalorder %s17, 1
      %p98 = scmp.ne.s32.totalorder %s93, %s95
      %p99 = scmp.eq.s32.totalorder %s17, 0
      %p100 = por %p98, %p99
      %p101 = scmp.ne.s32.totalorder %s93, %s95
      %p102 = scmp.eq.s32.totalorder %s22, 1
      %p103 = por %p101, %p102
      %p104 = scmp.ne.s32.totalorder %s95, %s96
      %p105 = scmp.eq.s32.totalorder %s22, 0
      %p106 = por %p104, %p105
      %p107 = scmp.ne.s32.totalorder %s95, %s96
      %p108 = scmp.eq.s32.totalorder %s23, 1
      %p109 = por %p107, %p108
      %p111 = scmp.ne.s32.totalorder %s96, %s110
      %p112 = scmp.eq.s32.totalorder %s23, 0
      %p113 = por %p111, %p112
      %s115 = sadd.s32 %s114, 1
      %p118 = scmp.eq.s32.totalorder %s17, 1
      %p119 = scmp.ne.s32.totalorder %s114, %s116
      %p120 = scmp.eq.s32.totalorder %s17, 0
      %p121 = por %p119, %p120
      %p122 = scmp.ne.s32.totalorder %s114, %s116
      %p123 = scmp.eq.s32.totalorder %s22, 1
      %p124 = por %p122, %p123
      %p125 = scmp.ne.s32.totalorder %s116, %s117
      %p126 = scmp.eq.s32.totalorder %s22, 0
      %p127 = por %p125, %p126
      %p128 = scmp.ne.s32.totalorder %s116, %s117
      %p129 = scmp.eq.s32.totalorder %s23, 1
      %p130 = por %p128, %p129
      %p132 = scmp.ne.s32.totalorder %s117, %s131
      %p133 = scmp.eq.s32.totalorder %s23, 0
      %p134 = por %p132, %p133
      %s136 = sadd.s32 %s135, 1
      %p139 = scmp.eq.s32.totalorder %s17, 1
      %p140 = scmp.ne.s32.totalorder %s135, %s137
      %p141 = scmp.eq.s32.totalorder %s17, 0
      %p142 = por %p140, %p141
      %p143 = scmp.ne.s32.totalorder %s135, %s137
      %p144 = scmp.eq.s32.totalorder %s22, 1
      %p145 = por %p143, %p144
      %p146 = scmp.ne.s32.totalorder %s137, %s138
      %p147 = scmp.eq.s32.totalorder %s22, 0
      %p148 = por %p146, %p147
      %p149 = scmp.ne.s32.totalorder %s137, %s138
      %p150 = scmp.eq.s32.totalorder %s23, 1
      %p151 = por %p149, %p150
      %p153 = scmp.ne.s32.totalorder %s138, %s152
      %p154 = scmp.eq.s32.totalorder %s23, 0
      %p155 = por %p153, %p154
      %s157 = sadd.s32 %s156, 1
      %p160 = scmp.eq.s32.totalorder %s17, 1
      %p161 = scmp.ne.s32.totalorder %s156, %s158
      %p162 = scmp.eq.s32.totalorder %s17, 0
      %p163 = por %p161, %p162
      %p164 = scmp.ne.s32.totalorder %s156, %s158
      %p165 = scmp.eq.s32.totalorder %s22, 1
      %p166 = por %p164, %p165
      %p167 = scmp.ne.s32.totalorder %s158, %s159
      %p168 = scmp.eq.s32.totalorder %s22, 0
      %p169 = por %p167, %p168
      %p170 = scmp.ne.s32.totalorder %s158, %s159
      %p171 = scmp.eq.s32.totalorder %s23, 1
      %p172 = por %p170, %p171
      %p174 = scmp.ne.s32.totalorder %s159, %s173
      %p175 = scmp.eq.s32.totalorder %s23, 0
      %p176 = por %p174, %p175
      %s177 = ssub.s32 %s17, %s24
      %p178 = scmp.eq.s32.totalorder %s177, 0
      %s180 = sadd.s32 %s179, 1
      %s181 = scalar_select %p178, %s179, %s180
      %p184 = pneg %p178
      %p185 = scmp.eq.s32.totalorder %s17, 1
      %p186 = por %p184, %p185
      %p187 = scmp.ne.s32.totalorder %s179, %s182
      %p188 = scmp.eq.s32.totalorder %s17, 0
      %p189 = por %p187, %p188
      %p190 = scmp.ne.s32.totalorder %s179, %s182
      %p191 = scmp.eq.s32.totalorder %s22, 1
      %p192 = por %p190, %p191
      %p193 = scmp.ne.s32.totalorder %s182, %s183
      %p194 = scmp.eq.s32.totalorder %s22, 0
      %p195 = por %p193, %p194
      %p196 = scmp.ne.s32.totalorder %s182, %s183
      %p197 = scmp.eq.s32.totalorder %s23, 1
      %p198 = por %p196, %p197
      %p200 = scmp.ne.s32.totalorder %s183, %s199
      %p201 = scmp.eq.s32.totalorder %s23, 0
      %p202 = por %p200, %p201
      %p203 = scmp.le.s32.totalorder 1, %s17
      %p204 = scmp.lt.s32.totalorder %s17, 3
      %p205 = pnand %p203, %p204
      %p206 = pneg %p205
      // Predicated region
      $region9: #{tpu_custom_call.1} parent=5 // pred_check
        _
      $region10: #{tpu_custom_call.1} parent=5 // pred_check_branch
        %208 = sbr.rel (%p205) target = $region12
      $region11: #{tpu_custom_call.1} parent=5 // pred_region
        %s209 = ssub.s32 %s17, 1
        // Predicated region
        $region13: #{tpu_custom_call.1} parent=11 // pred_check
          %p210 = pneg %p64
        $region14: #{tpu_custom_call.1} parent=11 // pred_check_branch
          %212 = sbr.rel (%p210) target = $region16
        $region15: #{tpu_custom_call.1} parent=11 // pred_region
          _
        $region16: #{tpu_custom_call.1} parent=11 // pred_fallthru
          _
        // Predicated region
        $region17: #{tpu_custom_call.1} parent=11 // pred_check
          %p213 = pneg %p85
        $region18: #{tpu_custom_call.1} parent=11 // pred_check_branch
          %215 = sbr.rel (%p213) target = $region20
        $region19: #{tpu_custom_call.1} parent=11 // pred_region
          _
        $region20: #{tpu_custom_call.1} parent=11 // pred_fallthru
          _
        // Predicated region
        $region21: #{tpu_custom_call.1} parent=11 // pred_check
          %p216 = pneg %p106
        $region22: #{tpu_custom_call.1} parent=11 // pred_check_branch
          %218 = sbr.rel (%p216) target = $region24
        $region23: #{tpu_custom_call.1} parent=11 // pred_region
          %s220 = ssub.s32 2048, 2048
          %221 = vsyncadd [#allocation3], %s220
          %s222 = sshll.u32 [#allocation2], 4
          %s223 = int_to_ptr.vmem [resolvable:$true] %s222
          %228 = dma.hbm_to_vmem [thread:$0]  %s3, 2048, %s223, [#allocation3], 128, 128, 8
        $region24: #{tpu_custom_call.1} parent=11 // pred_fallthru
          _
        // Predicated region
        $region25: #{tpu_custom_call.1} parent=11 // pred_check
          %p229 = pneg %p127
        $region26: #{tpu_custom_call.1} parent=11 // pred_check_branch
          %231 = sbr.rel (%p229) target = $region28
        $region27: #{tpu_custom_call.1} parent=11 // pred_region
          _
        $region28: #{tpu_custom_call.1} parent=11 // pred_fallthru
          _
        // Predicated region
        $region29: #{tpu_custom_call.1} parent=11 // pred_check
          %p232 = pneg %p148
        $region30: #{tpu_custom_call.1} parent=11 // pred_check_branch
          %234 = sbr.rel (%p232) target = $region32
        $region31: #{tpu_custom_call.1} parent=11 // pred_region
          _
        $region32: #{tpu_custom_call.1} parent=11 // pred_fallthru
          _
        // Predicated region
        $region33: #{tpu_custom_call.1} parent=11 // pred_check
          %p235 = pneg %p169
        $region34: #{tpu_custom_call.1} parent=11 // pred_check_branch
          %237 = sbr.rel (%p235) target = $region36
        $region35: #{tpu_custom_call.1} parent=11 // pred_region
          _
        $region36: #{tpu_custom_call.1} parent=11 // pred_fallthru
          _
      $region12: #{tpu_custom_call.1} parent=5 // pred_fallthru
        _
      %p238 = scmp.lt.s32.totalorder %s17, 2
      // Predicated region
      $region37: #{tpu_custom_call.1} parent=5 // pred_check
        %p239 = pneg %p238
      $region38: #{tpu_custom_call.1} parent=5 // pred_check_branch
        %241 = sbr.rel (%p239) target = $region40
      $region39: #{tpu_custom_call.1} parent=5 // pred_region
        // Predicated region
        $region41: #{tpu_custom_call.1} parent=39 // pred_check
          %p242 = pneg %p37
        $region42: #{tpu_custom_call.1} parent=39 // pred_check_branch
          %244 = sbr.rel (%p242) target = $region44
        $region43: #{tpu_custom_call.1} parent=39 // pred_region
          %p245 = scmp.lt.s32.totalorder %s17, 1
          %s246 = scalar_select %p245, %s17, 1
          %s247 = smul.addr %s246, 8
          %s248 = scalar_lea.vmem %s0, %s247
        $region44: #{tpu_custom_call.1} parent=39 // pred_fallthru
          _
      $region40: #{tpu_custom_call.1} parent=5 // pred_fallthru
        _
      %p249 = scmp.le.s32.totalorder 1, %s17
      %p250 = scmp.lt.s32.totalorder %s17, 3
      %p251 = pnand %p249, %p250
      %p252 = pneg %p251
      // Predicated region
      $region45: #{tpu_custom_call.1} parent=5 // pred_check
        _
      $region46: #{tpu_custom_call.1} parent=5 // pred_check_branch
        %254 = sbr.rel (%p251) target = $region48
      $region47: #{tpu_custom_call.1} parent=5 // pred_region
        %s255 = ssub.s32 %s17, 1
        // Predicated region
        $region49: #{tpu_custom_call.1} parent=47 // pred_check
          %p256 = pneg %p106
        $region50: #{tpu_custom_call.1} parent=47 // pred_check_branch
          %258 = sbr.rel (%p256) target = $region52
        $region51: #{tpu_custom_call.1} parent=47 // pred_region
          %259 = dma.done [#allocation3], 2048
        $region52: #{tpu_custom_call.1} parent=47 // pred_fallthru
          _
        %p260 = scmp.lt.s32.totalorder %s22, 1
        %s261 = scalar_select %p260, %s22, 1
        %s262 = smul.addr %s261, 8
        %s263 = scalar_lea.vmem %s0, %s262
        %p264 = pneg %p43
        %p265 = pneg %p40
        %p266 = pneg %p64
        %p267 = pneg %p61
        %p268 = pneg %p85
        %p269 = pneg %p82
        %p270 = pneg %p106
        %p271 = pneg %p103
        %p272 = pneg %p127
        %p273 = pneg %p124
        %p274 = pneg %p148
        %p275 = pneg %p145
        %p276 = pneg %p169
        %p277 = pneg %p166
        %p278 = pneg %p195
        %p279 = pneg %p192
        %s280 = sand.u32 %s182, 1
        %s281 = scalar_lea.sflag [#allocation4], %s280
        %s282 = sand.u32 %s182, 1
        %s283 = smul.addr %s282, 8
        %s284 = scalar_lea.vmem [#allocation5], %s283
        %p285 = scmp.lt.s32.totalorder %s22, 1
        %s286 = scalar_select %p285, %s22, 1
        %s287 = smul.addr %s286, 8
        %s288 = scalar_lea.vmem %s0, %s287
        %v289 = vld [vmem:[%s288] sm:$0xff]
        %v290 = vld [vmem:[%s1] sm:$0xff]
        %v291 = vld [vmem:[%s1 + $0x8] sm:$0xff]
        %v292 = vld [vmem:[%s1 + $0x10] sm:$0xff]
        %v293 = vld [vmem:[%s1 + $0x18] sm:$0xff]
        %v294 = vld [vmem:[%s1 + $0x20] sm:$0xff]
        %v295 = vld [vmem:[%s1 + $0x28] sm:$0xff]
        %v296 = vld [vmem:[%s1 + $0x30] sm:$0xff]
        %v297 = vld [vmem:[%s1 + $0x38] sm:$0xff]
        %v298 = vld [vmem:[%s1 + $0x40] sm:$0xff]
        %v299 = vld [vmem:[%s1 + $0x48] sm:$0xff]
        %v300 = vld [vmem:[%s1 + $0x50] sm:$0xff]
        %v301 = vld [vmem:[%s1 + $0x58] sm:$0xff]
        %v302 = vld [vmem:[%s1 + $0x60] sm:$0xff]
        %v303 = vld [vmem:[%s1 + $0x68] sm:$0xff]
        %v304 = vld [vmem:[%s1 + $0x70] sm:$0xff]
        %v305 = vld [vmem:[%s1 + $0x78] sm:$0xff]
        %v306 = vld [vmem:[%s2] sm:$0x1]
        %v308 = vlaneseq
        %v309 = vshrl.u32 %v308, 7
        %v310 = vsub.s32 0, %v309
        %v311 = vrot.slane %v306, %v310
        %313 = vmatprep.subr.mxu0 0.0
        %314 = vmatpush1.msra.mxu0 %v290
        %315 = vmatprep.subr.mxu0 0.0
        %316 = vmatpush1.msra.mxu0 %v291
        %317 = vmatprep.subr.mxu0 0.0
        %318 = vmatpush1.msra.mxu0 %v292
        %319 = vmatprep.subr.mxu0 0.0
        %320 = vmatpush1.msra.mxu0 %v293
        %321 = vmatprep.subr.mxu0 0.0
        %322 = vmatpush1.msra.mxu0 %v294
        %323 = vmatprep.subr.mxu0 0.0
        %324 = vmatpush1.msra.mxu0 %v295
        %325 = vmatprep.subr.mxu0 0.0
        %326 = vmatpush1.msra.mxu0 %v296
        %327 = vmatprep.subr.mxu0 0.0
        %328 = vmatpush1.msra.mxu0 %v297
        %329 = vmatprep.subr.mxu0 0.0
        %330 = vmatpush1.msra.mxu0 %v298
        %331 = vmatprep.subr.mxu0 0.0
        %332 = vmatpush1.msra.mxu0 %v299
        %333 = vmatprep.subr.mxu0 0.0
        %334 = vmatpush1.msra.mxu0 %v300
        %335 = vmatprep.subr.mxu0 0.0
        %336 = vmatpush1.msra.mxu0 %v301
        %337 = vmatprep.subr.mxu0 0.0
        %338 = vmatpush1.msra.mxu0 %v302
        %339 = vmatprep.subr.mxu0 0.0
        %340 = vmatpush1.msra.mxu0 %v303
        %341 = vmatprep.subr.mxu0 0.0
        %342 = vmatpush1.msra.mxu0 %v304
        %343 = vmatprep.subr.mxu0 0.0
        %344 = vmatpush1.msra.mxu0 %v305
        %345 = vmatprep.subr.mxu0 0.0
        %346 = vmatpush1.msra.mxu0 0.0
        %347 = vmatprep.subr.mxu0 0.0
        %348 = vmatpush1.msra.mxu0 0.0
        %349 = vmatprep.subr.mxu0 0.0
        %350 = vmatpush1.msra.mxu0 0.0
        %351 = vmatprep.subr.mxu0 0.0
        %352 = vmatpush1.msra.mxu0 0.0
        %353 = vmatprep.subr.mxu0 0.0
        %354 = vmatpush1.msra.mxu0 0.0
        %355 = vmatprep.subr.mxu0 0.0
        %356 = vmatpush1.msra.mxu0 0.0
        %357 = vmatprep.subr.mxu0 0.0
        %358 = vmatpush1.msra.mxu0 0.0
        %359 = vmatprep.subr.mxu0 0.0
        %360 = vmatpush1.msra.mxu0 0.0
        %361 = vmatprep.subr.mxu0 0.0
        %362 = vmatpush1.msra.mxu0 0.0
        %363 = vmatprep.subr.mxu0 0.0
        %364 = vmatpush1.msra.mxu0 0.0
        %365 = vmatprep.subr.mxu0 0.0
        %366 = vmatpush1.msra.mxu0 0.0
        %367 = vmatprep.subr.mxu0 0.0
        %368 = vmatpush1.msra.mxu0 0.0
        %369 = vmatprep.subr.mxu0 0.0
        %370 = vmatpush1.msra.mxu0 0.0
        %371 = vmatprep.subr.mxu0 0.0
        %372 = vmatpush1.msra.mxu0 0.0
        %373 = vmatprep.subr.mxu0 0.0
        %374 = vmatpush1.msra.mxu0 0.0
        %375 = vmatprep.subr.mxu0 0.0
        %376 = vmatpush1.msra.mxu0 0.0
        %377 = vmatprep.mubr.f32.mxu0 0.0
        %378 = vmatmul.mubr.f32.gmra.mrb[0].mxu0 %v289
        %v379 = vpop.f32.mrb[0].mxu0
        %v380 = vadd.f32 %v311, %v379
        %v381 = vpop.f32.mrb[0].mxu0
        %382 = vdwg.mxu0
        %v383 = vmax.f32 %v380, 0.0
        %v384 = vld [vmem:[#allocation2] sm:$0xff]
        %v385 = vld [vmem:[#allocation2 + $0x8] sm:$0xff]
        %v386 = vld [vmem:[#allocation2 + $0x10] sm:$0xff]
        %v387 = vld [vmem:[#allocation2 + $0x18] sm:$0xff]
        %v388 = vld [vmem:[#allocation2 + $0x20] sm:$0xff]
        %v389 = vld [vmem:[#allocation2 + $0x28] sm:$0xff]
        %v390 = vld [vmem:[#allocation2 + $0x30] sm:$0xff]
        %v391 = vld [vmem:[#allocation2 + $0x38] sm:$0xff]
        %v392 = vld [vmem:[#allocation2 + $0x40] sm:$0xff]
        %v393 = vld [vmem:[#allocation2 + $0x48] sm:$0xff]
        %v394 = vld [vmem:[#allocation2 + $0x50] sm:$0xff]
        %v395 = vld [vmem:[#allocation2 + $0x58] sm:$0xff]
        %v396 = vld [vmem:[#allocation2 + $0x60] sm:$0xff]
        %v397 = vld [vmem:[#allocation2 + $0x68] sm:$0xff]
        %v398 = vld [vmem:[#allocation2 + $0x70] sm:$0xff]
        %v399 = vld [vmem:[#allocation2 + $0x78] sm:$0xff]
        %v400 = vld [vmem:[%s4] sm:$0x1]
        %v402 = vlaneseq
        %v403 = vshrl.u32 %v402, 7
        %v404 = vsub.s32 0, %v403
        %v405 = vrot.slane %v400, %v404
        %407 = vmatprep.subr.mxu0 0.0
        %408 = vmatpush1.msra.mxu0 %v384
        %409 = vmatprep.subr.mxu0 0.0
        %410 = vmatpush1.msra.mxu0 %v385
        %411 = vmatprep.subr.mxu0 0.0
        %412 = vmatpush1.msra.mxu0 %v386
        %413 = vmatprep.subr.mxu0 0.0
        %414 = vmatpush1.msra.mxu0 %v387
        %415 = vmatprep.subr.mxu0 0.0
        %416 = vmatpush1.msra.mxu0 %v388
        %417 = vmatprep.subr.mxu0 0.0
        %418 = vmatpush1.msra.mxu0 %v389
        %419 = vmatprep.subr.mxu0 0.0
        %420 = vmatpush1.msra.mxu0 %v390
        %421 = vmatprep.subr.mxu0 0.0
        %422 = vmatpush1.msra.mxu0 %v391
        %423 = vmatprep.subr.mxu0 0.0
        %424 = vmatpush1.msra.mxu0 %v392
        %425 = vmatprep.subr.mxu0 0.0
        %426 = vmatpush1.msra.mxu0 %v393
        %427 = vmatprep.subr.mxu0 0.0
        %428 = vmatpush1.msra.mxu0 %v394
        %429 = vmatprep.subr.mxu0 0.0
        %430 = vmatpush1.msra.mxu0 %v395
        %431 = vmatprep.subr.mxu0 0.0
        %432 = vmatpush1.msra.mxu0 %v396
        %433 = vmatprep.subr.mxu0 0.0
        %434 = vmatpush1.msra.mxu0 %v397
        %435 = vmatprep.subr.mxu0 0.0
        %436 = vmatpush1.msra.mxu0 %v398
        %437 = vmatprep.subr.mxu0 0.0
        %438 = vmatpush1.msra.mxu0 %v399
        %439 = vmatprep.subr.mxu0 0.0
        %440 = vmatpush1.msra.mxu0 0.0
        %441 = vmatprep.subr.mxu0 0.0
        %442 = vmatpush1.msra.mxu0 0.0
        %443 = vmatprep.subr.mxu0 0.0
        %444 = vmatpush1.msra.mxu0 0.0
        %445 = vmatprep.subr.mxu0 0.0
        %446 = vmatpush1.msra.mxu0 0.0
        %447 = vmatprep.subr.mxu0 0.0
        %448 = vmatpush1.msra.mxu0 0.0
        %449 = vmatprep.subr.mxu0 0.0
        %450 = vmatpush1.msra.mxu0 0.0
        %451 = vmatprep.subr.mxu0 0.0
        %452 = vmatpush1.msra.mxu0 0.0
        %453 = vmatprep.subr.mxu0 0.0
        %454 = vmatpush1.msra.mxu0 0.0
        %455 = vmatprep.subr.mxu0 0.0
        %456 = vmatpush1.msra.mxu0 0.0
        %457 = vmatprep.subr.mxu0 0.0
        %458 = vmatpush1.msra.mxu0 0.0
        %459 = vmatprep.subr.mxu0 0.0
        %460 = vmatpush1.msra.mxu0 0.0
        %461 = vmatprep.subr.mxu0 0.0
        %462 = vmatpush1.msra.mxu0 0.0
        %463 = vmatprep.subr.mxu0 0.0
        %464 = vmatpush1.msra.mxu0 0.0
        %465 = vmatprep.subr.mxu0 0.0
        %466 = vmatpush1.msra.mxu0 0.0
        %467 = vmatprep.subr.mxu0 0.0
        %468 = vmatpush1.msra.mxu0 0.0
        %469 = vmatprep.subr.mxu0 0.0
        %470 = vmatpush1.msra.mxu0 0.0
        %471 = vmatprep.mubr.f32.mxu0 0.0
        %472 = vmatmul.mubr.f32.gmra.mrb[0].mxu0 %v383
        %v473 = vpop.f32.mrb[0].mxu0
        %v474 = vadd.f32 %v405, %v473
        %v475 = vpop.f32.mrb[0].mxu0
        %476 = vdwg.mxu0
        %v477 = vmax.f32 %v474, 0.0
        %v478 = vld [vmem:[%s5] sm:$0xff]
        %v479 = vld [vmem:[%s5 + $0x8] sm:$0xff]
        %v480 = vld [vmem:[%s5 + $0x10] sm:$0xff]
        %v481 = vld [vmem:[%s5 + $0x18] sm:$0xff]
        %v482 = vld [vmem:[%s5 + $0x20] sm:$0xff]
        %v483 = vld [vmem:[%s5 + $0x28] sm:$0xff]
        %v484 = vld [vmem:[%s5 + $0x30] sm:$0xff]
        %v485 = vld [vmem:[%s5 + $0x38] sm:$0xff]
        %v486 = vld [vmem:[%s5 + $0x40] sm:$0xff]
        %v487 = vld [vmem:[%s5 + $0x48] sm:$0xff]
        %v488 = vld [vmem:[%s5 + $0x50] sm:$0xff]
        %v489 = vld [vmem:[%s5 + $0x58] sm:$0xff]
        %v490 = vld [vmem:[%s5 + $0x60] sm:$0xff]
        %v491 = vld [vmem:[%s5 + $0x68] sm:$0xff]
        %v492 = vld [vmem:[%s5 + $0x70] sm:$0xff]
        %v493 = vld [vmem:[%s5 + $0x78] sm:$0xff]
        %v494 = vld [vmem:[%s6] sm:$0x1]
        %v496 = vlaneseq
        %v497 = vshrl.u32 %v496, 7
        %v498 = vsub.s32 0, %v497
        %v499 = vrot.slane %v494, %v498
        %501 = vmatprep.subr.mxu0 0.0
        %502 = vmatpush1.msra.mxu0 %v478
        %503 = vmatprep.subr.mxu0 0.0
        %504 = vmatpush1.msra.mxu0 %v479
        %505 = vmatprep.subr.mxu0 0.0
        %506 = vmatpush1.msra.mxu0 %v480
        %507 = vmatprep.subr.mxu0 0.0
        %508 = vmatpush1.msra.mxu0 %v481
        %509 = vmatprep.subr.mxu0 0.0
        %510 = vmatpush1.msra.mxu0 %v482
        %511 = vmatprep.subr.mxu0 0.0
        %512 = vmatpush1.msra.mxu0 %v483
        %513 = vmatprep.subr.mxu0 0.0
        %514 = vmatpush1.msra.mxu0 %v484
        %515 = vmatprep.subr.mxu0 0.0
        %516 = vmatpush1.msra.mxu0 %v485
        %517 = vmatprep.subr.mxu0 0.0
        %518 = vmatpush1.msra.mxu0 %v486
        %519 = vmatprep.subr.mxu0 0.0
        %520 = vmatpush1.msra.mxu0 %v487
        %521 = vmatprep.subr.mxu0 0.0
        %522 = vmatpush1.msra.mxu0 %v488
        %523 = vmatprep.subr.mxu0 0.0
        %524 = vmatpush1.msra.mxu0 %v489
        %525 = vmatprep.subr.mxu0 0.0
        %526 = vmatpush1.msra.mxu0 %v490
        %527 = vmatprep.subr.mxu0 0.0
        %528 = vmatpush1.msra.mxu0 %v491
        %529 = vmatprep.subr.mxu0 0.0
        %530 = vmatpush1.msra.mxu0 %v492
        %531 = vmatprep.subr.mxu0 0.0
        %532 = vmatpush1.msra.mxu0 %v493
        %533 = vmatprep.subr.mxu0 0.0
        %534 = vmatpush1.msra.mxu0 0.0
        %535 = vmatprep.subr.mxu0 0.0
        %536 = vmatpush1.msra.mxu0 0.0
        %537 = vmatprep.subr.mxu0 0.0
        %538 = vmatpush1.msra.mxu0 0.0
        %539 = vmatprep.subr.mxu0 0.0
        %540 = vmatpush1.msra.mxu0 0.0
        %541 = vmatprep.subr.mxu0 0.0
        %542 = vmatpush1.msra.mxu0 0.0
        %543 = vmatprep.subr.mxu0 0.0
        %544 = vmatpush1.msra.mxu0 0.0
        %545 = vmatprep.subr.mxu0 0.0
        %546 = vmatpush1.msra.mxu0 0.0
        %547 = vmatprep.subr.mxu0 0.0
        %548 = vmatpush1.msra.mxu0 0.0
        %549 = vmatprep.subr.mxu0 0.0
        %550 = vmatpush1.msra.mxu0 0.0
        %551 = vmatprep.subr.mxu0 0.0
        %552 = vmatpush1.msra.mxu0 0.0
        %553 = vmatprep.subr.mxu0 0.0
        %554 = vmatpush1.msra.mxu0 0.0
        %555 = vmatprep.subr.mxu0 0.0
        %556 = vmatpush1.msra.mxu0 0.0
        %557 = vmatprep.subr.mxu0 0.0
        %558 = vmatpush1.msra.mxu0 0.0
        %559 = vmatprep.subr.mxu0 0.0
        %560 = vmatpush1.msra.mxu0 0.0
        %561 = vmatprep.subr.mxu0 0.0
        %562 = vmatpush1.msra.mxu0 0.0
        %563 = vmatprep.subr.mxu0 0.0
        %564 = vmatpush1.msra.mxu0 0.0
        %565 = vmatprep.mubr.f32.mxu0 0.0
        %566 = vmatmul.mubr.f32.gmra.mrb[0].mxu0 %v477
        %v567 = vpop.f32.mrb[0].mxu0
        %v568 = vadd.f32 %v499, %v567
        %v569 = vpop.f32.mrb[0].mxu0
        %570 = vdwg.mxu0
        %vm571 = vcmask 130048
        %572 = vst.msk [vmem:[%s284] sm:$0xff] %vm571, %v568
        %s573 = sand.u32 %s182, 1
        %s574 = scalar_lea.sflag [#allocation4], %s573
        %s575 = sand.u32 %s182, 1
        %s576 = smul.addr %s575, 8
        %s577 = scalar_lea.vmem [#allocation5], %s576
        // Predicated region
        $region53: #{tpu_custom_call.1} parent=47 // pred_check
          %p578 = pneg %p192
        $region54: #{tpu_custom_call.1} parent=47 // pred_check_branch
          %580 = sbr.rel (%p578) target = $region56
        $region55: #{tpu_custom_call.1} parent=47 // pred_region
          %s582 = ssub.s32 128, 128
          %583 = vsyncadd %s574, %s582
          %s584 = smul.addr %s22, 128
          %s585 = scalar_lea.hbm %s7, %s584
          %s587 = sshll.u32 %s577, 4
          %s588 = int_to_ptr.vmem [resolvable:$true] %s587
          %590 = dma.vmem_to_hbm [thread:$0]  %s588, 128, %s585, %s574
        $region56: #{tpu_custom_call.1} parent=47 // pred_fallthru
          _
      $region48: #{tpu_custom_call.1} parent=5 // pred_fallthru
        _
      %p591 = scmp.le.s32.totalorder 2, %s17
      // Predicated region
      $region57: #{tpu_custom_call.1} parent=5 // pred_check
        %p592 = pneg %p591
      $region58: #{tpu_custom_call.1} parent=5 // pred_check_branch
        %594 = sbr.rel (%p592) target = $region60
      $region59: #{tpu_custom_call.1} parent=5 // pred_region
        %s595 = ssub.s32 %s17, 2
        // Predicated region
        $region61: #{tpu_custom_call.1} parent=59 // pred_check
          %p596 = pneg %p198
        $region62: #{tpu_custom_call.1} parent=59 // pred_check_branch
          %598 = sbr.rel (%p596) target = $region64
        $region63: #{tpu_custom_call.1} parent=59 // pred_region
          %s599 = sand.u32 %s183, 1
          %s600 = scalar_lea.sflag [#allocation4], %s599
          %s601 = sand.u32 %s183, 1
          %s602 = smul.addr %s601, 8
          %s603 = scalar_lea.vmem [#allocation5], %s602
          %604 = dma.done %s600, 128
        $region64: #{tpu_custom_call.1} parent=59 // pred_fallthru
          _
      $region60: #{tpu_custom_call.1} parent=5 // pred_fallthru
        _
    $region6: #{tpu_custom_call.1} parent=1 // loop_footer
      %s21 = sadd.s32 1, %s17
    $region7: #{tpu_custom_call.1} parent=1 // loop_footer_branch
      %16 = sbr.rel target = $region3
    $region8: #{tpu_custom_call.1} parent=1 // loop_exit
      _
    %605 = vsyncpa [#allocation3], 1
    %s606 = scalar_lea.sflag [#allocation3], 1
    %607 = vsyncpa %s606, 1
    %608 = vsyncpa [#allocation4], 1
    %s609 = scalar_lea.sflag [#allocation4], 1
    %610 = vsyncpa %s609, 1

</llo_original>
